<compile_context>
chip_gen: v7x
topology: tpu7x:2x2x1
jax: 0.10.0
libtpu: 0.0.40
codegen_flags: <defaults>
</compile_context>

<pallas_src>
import functools

import jax
import jax.numpy as jnp
from jax import lax
from jax.experimental import pallas as pl
from jax.experimental.pallas import tpu as pltpu

_LANES = 128


def _device_params():
    """Generation-specific (ncores, row_tile, vmem_limit_bytes)."""
    try:
        kind = jax.devices()[0].device_kind.lower()
    except Exception:  # pragma: no cover - defensive
        kind = ""
    if "v7" in kind:
        # 2 TCs; 3.2 TB/s -> big tiles. 2 inputs x 2 bufs x 4 MiB = 16 MiB.
        return {"ncores": 2, "row_tile": 8192, "vmem_limit": 30 << 20}
    if "v6" in kind:
        # single TC; 2 inputs x 2 bufs x 2 MiB = 8 MiB, well under 32 MiB scoped.
        return {"ncores": 1, "row_tile": 4096, "vmem_limit": 32 << 20}
    if "v5e" in kind or "v5 lite" in kind or "v5lite" in kind:
        # 16 MiB scoped default; 2 x 2 x 1 MiB = 4 MiB fits with headroom.
        return {"ncores": 1, "row_tile": 2048, "vmem_limit": None}
    # Unknown / older part: conservative.
    return {"ncores": 1, "row_tile": 1024, "vmem_limit": None}


def _charbonnier_kernel(x_ref, y_ref, acc_ref, *,
                        eps2, rows_total, nblocks, row_tile, bpc):
    c = pl.program_id(0)          # core / partial-sum index ("parallel")
    i = pl.program_id(1)          # reduction step within this core ("arbitrary")
    blk = c * bpc + i             # logical row-block index (may be a clamped dup)

    @pl.when(i == 0)
    def _():
        acc_ref[...] = jnp.zeros_like(acc_ref)

    d = x_ref[...].astype(jnp.float32) - y_ref[...].astype(jnp.float32)
    v = jnp.sqrt(d * d + jnp.float32(eps2))

    # Fast path: fully-interior block -> no masking work at all.
    @pl.when(blk < nblocks - 1)
    def _():
        acc_ref[...] += jnp.sum(v, axis=0, keepdims=True)

    # Slow path: last logical block (possibly a ragged edge block with
    # unspecified pad rows) and any clamped duplicate block (blk >= nblocks,
    # whose `valid` is <= 0 so it contributes exactly zero). Row-level
    # threshold only -> no full linear index, no int32 overflow.
    @pl.when(blk >= nblocks - 1)
    def _():
        valid = jnp.int32(rows_total) - blk * jnp.int32(row_tile)
        row_ids = lax.broadcasted_iota(jnp.int32, v.shape, 0)
        vm = jnp.where(row_ids < valid, v, jnp.float32(0.0))
        acc_ref[...] += jnp.sum(vm, axis=0, keepdims=True)


def charbonnier_loss(x, y, eps=1e-3):
    assert x.shape == y.shape, (x.shape, y.shape)
    n_true = x.size
    eps2 = float(eps) * float(eps)

    xf = x.reshape(-1)
    yf = y.reshape(-1)
    n_main = (n_true // _LANES) * _LANES

    # Ragged tail (<128 elements): plain jnp in the wrapper. This avoids the
    # old full-array jnp.pad (an extra HBM read+write of BOTH inputs).
    if n_main < n_true:
        dt = xf[n_main:].astype(jnp.float32) - yf[n_main:].astype(jnp.float32)
        tail_sum = jnp.sum(jnp.sqrt(dt * dt + jnp.float32(eps2)))
    else:
        tail_sum = jnp.float32(0.0)

    if n_main == 0:
        return tail_sum / jnp.float32(n_true)

    rows = n_main // _LANES
    x2 = xf[:n_main].reshape(rows, _LANES)
    y2 = yf[:n_main].reshape(rows, _LANES)

    params = _device_params()
    row_tile = params["row_tile"]
    if rows <= row_tile:
        row_tile = rows                      # block == full dim is always legal
    nblocks = pl.cdiv(rows, row_tile)
    ncores = min(params["ncores"], nblocks)  # never schedule an empty core
    bpc = pl.cdiv(nblocks, ncores)           # row-blocks handled per core

    def in_map(c, i):
        # Clamp out-of-range logical blocks (odd split); their contribution is
        # masked to zero in the kernel's slow path.
        return (jnp.minimum(c * bpc + i, nblocks - 1), 0)

    kernel = functools.partial(
        _charbonnier_kernel,
        eps2=eps2,
        rows_total=int(rows),
        nblocks=int(nblocks),
        row_tile=int(row_tile),
        bpc=int(bpc),
    )

    in_bytes = int(n_main) * (x.dtype.itemsize + y.dtype.itemsize)
    cost = pl.CostEstimate(
        flops=4 * int(n_main),
        transcendentals=int(n_main),
        bytes_accessed=in_bytes + ncores * _LANES * 4,
    )

    cp_kwargs = {"dimension_semantics": ("parallel", "arbitrary")}
    if params["vmem_limit"] is not None:
        cp_kwargs["vmem_limit_bytes"] = params["vmem_limit"]

    partials = pl.pallas_call(
        kernel,
        out_shape=jax.ShapeDtypeStruct((ncores, 1, _LANES), jnp.float32),
        grid_spec=pltpu.PrefetchScalarGridSpec(
            num_scalar_prefetch=0,
            grid=(ncores, bpc),
            in_specs=[
                pl.BlockSpec((row_tile, _LANES), in_map),
                pl.BlockSpec((row_tile, _LANES), in_map),
            ],
            out_specs=pl.BlockSpec((None, 1, _LANES), lambda c, i: (c, 0, 0)),
        ),
        compiler_params=pltpu.CompilerParams(**cp_kwargs),
        cost_estimate=cost,
    )(x2, y2)

    # Final tiny tree reduction of the per-core 128-lane accumulators + mean.
    total = jnp.sum(partials, dtype=jnp.float32) + tail_sum
    return total / jnp.float32(n_true)


if __name__ == "__main__":
    key = jax.random.PRNGKey(0)
    kx, ky = jax.random.split(key)

    def reference(a, b, eps=1e-3):
        d = a.astype(jnp.float32) - b.astype(jnp.float32)
        return jnp.mean(jnp.sqrt(d * d + jnp.float32(eps) * jnp.float32(eps)))

    # Main check: NCHW input matching the PyTorch module convention.
    shape = (2, 4, 16, 16)
    x = jax.random.normal(kx, shape, dtype=jnp.float32)
    y = jax.random.normal(ky, shape, dtype=jnp.float32)
    loss = jax.block_until_ready(charbonnier_loss(x, y, eps=1e-3))
    ref = reference(x, y, eps=1e-3)
    assert jnp.allclose(loss, ref, rtol=1e-5, atol=1e-6), (loss, ref)

    # Ragged check (size not a multiple of 128 -> jnp tail + in-kernel edge mask).
    shape2 = (2, 3, 17, 19)
    x2 = jax.random.normal(kx, shape2, dtype=jnp.float32)
    y2 = jax.random.normal(ky, shape2, dtype=jnp.float32)
    loss2 = jax.block_until_ready(charbonnier_loss(x2, y2, eps=1e-3))
    ref2 = reference(x2, y2, eps=1e-3)
    assert jnp.allclose(loss2, ref2, rtol=1e-5, atol=1e-6), (loss2, ref2)

    print("KERNEL_OK")
</pallas_src>

<mosaic_0001>
module attributes {stable_mosaic.version = 11 : i64} {
  func.func @_charbonnier_kernel(%arg0: i32, %arg1: i32, %arg2: memref<16x128xf32, #tpu.memory_space<vmem>>, %arg3: memref<16x128xf32, #tpu.memory_space<vmem>>, %arg4: memref<1x1x128xf32, #tpu.memory_space<vmem>>) attributes {dimension_semantics = [#tpu.dimension_semantics<parallel>, #tpu.dimension_semantics<arbitrary>], iteration_bounds = array<i64: 1, 1>, scalar_prefetch = 0 : i64, scratch_operands = 0 : i64, tpu.core_type = #tpu.core_type<tc>, window_params = [{transform_indices = @transform_0, window_bounds = array<i64: 16, 128>}, {transform_indices = @transform_1, window_bounds = array<i64: 16, 128>}, {transform_indices = @transform_2, window_bounds = array<i64: 1, 1, 128>}]} {
    %c1_i32 = arith.constant 1 : i32
    %0 = arith.muli %arg0, %c1_i32 : i32
    %1 = arith.addi %0, %arg1 : i32
    %c0_i32 = arith.constant 0 : i32
    %2 = arith.cmpi eq, %arg1, %c0_i32 : i32
    %3 = arith.extui %2 : i1 to i32
    %c0_i32_0 = arith.constant 0 : i32
    %4 = arith.cmpi ne, %3, %c0_i32_0 : i32
    scf.if %4 {
      %cst_8 = arith.constant 0.000000e+00 : f32
      %18 = vector.broadcast %cst_8 : f32 to vector<1x128xf32>
      %c0_9 = arith.constant 0 : index
      %c0_10 = arith.constant 0 : index
      %c0_11 = arith.constant 0 : index
      %19 = vector.load %arg4[%c0_9, %c0_10, %c0_11] : memref<1x1x128xf32, #tpu.memory_space<vmem>>, vector<1x1x128xf32>
      %20 = vector.shape_cast %19 : vector<1x1x128xf32> to vector<1x128xf32>
      %21 = vector.shape_cast %18 : vector<1x128xf32> to vector<1x1x128xf32>
      tpu.vector_store %arg4[%c0_9, %c0_10, %c0_11], %21 {strides = array<i32>} : memref<1x1x128xf32, #tpu.memory_space<vmem>>, vector<1x1x128xf32>,
    } else {
    }
    %c0 = arith.constant 0 : index
    %c0_1 = arith.constant 0 : index
    %5 = vector.load %arg2[%c0, %c0_1] : memref<16x128xf32, #tpu.memory_space<vmem>>, vector<16x128xf32>
    %c0_2 = arith.constant 0 : index
    %c0_3 = arith.constant 0 : index
    %6 = vector.load %arg3[%c0_2, %c0_3] : memref<16x128xf32, #tpu.memory_space<vmem>>, vector<16x128xf32>
    %7 = arith.subf %5, %6 : vector<16x128xf32>
    %8 = arith.mulf %7, %7 : vector<16x128xf32>
    %cst = arith.constant 9.99999997E-7 : f32
    %9 = vector.broadcast %cst : f32 to vector<16x128xf32>
    %10 = arith.addf %8, %9 : vector<16x128xf32>
    %11 = math.sqrt %10 : vector<16x128xf32>
    %c0_i32_4 = arith.constant 0 : i32
    %12 = arith.cmpi slt, %1, %c0_i32_4 : i32
    %13 = arith.extui %12 : i1 to i32
    %c0_i32_5 = arith.constant 0 : i32
    %14 = arith.cmpi ne, %13, %c0_i32_5 : i32
    scf.if %14 {
      %c0_8 = arith.constant 0 : index
      %c0_9 = arith.constant 0 : index
      %c0_10 = arith.constant 0 : index
      %18 = vector.load %arg4[%c0_8, %c0_9, %c0_10] : memref<1x1x128xf32, #tpu.memory_space<vmem>>, vector<1x1x128xf32>
      %19 = vector.shape_cast %18 : vector<1x1x128xf32> to vector<1x128xf32>
      %cst_11 = arith.constant dense<0.000000e+00> : vector<128xf32>
      %20 = vector.multi_reduction <add>, %11, %cst_11 [0] : vector<16x128xf32> to vector<128xf32>
      %21 = vector.shape_cast %20 : vector<128xf32> to vector<1x128xf32>
      %22 = arith.addf %19, %21 : vector<1x128xf32>
      %c0_12 = arith.constant 0 : index
      %c0_13 = arith.constant 0 : index
      %c0_14 = arith.constant 0 : index
      %23 = vector.load %arg4[%c0_12, %c0_13, %c0_14] : memref<1x1x128xf32, #tpu.memory_space<vmem>>, vector<1x1x128xf32>
      %24 = vector.shape_cast %23 : vector<1x1x128xf32> to vector<1x128xf32>
      %25 = vector.shape_cast %22 : vector<1x128xf32> to vector<1x1x128xf32>
      tpu.vector_store %arg4[%c0_12, %c0_13, %c0_14], %25 {strides = array<i32>} : memref<1x1x128xf32, #tpu.memory_space<vmem>>, vector<1x1x128xf32>,
    } else {
    }
    %c0_i32_6 = arith.constant 0 : i32
    %15 = arith.cmpi sge, %1, %c0_i32_6 : i32
    %16 = arith.extui %15 : i1 to i32
    %c0_i32_7 = arith.constant 0 : i32
    %17 = arith.cmpi ne, %16, %c0_i32_7 : i32
    scf.if %17 {
      %c16_i32 = arith.constant 16 : i32
      %18 = arith.muli %1, %c16_i32 : i32
      %c16_i32_8 = arith.constant 16 : i32
      %19 = arith.subi %c16_i32_8, %18 : i32
      %20 = tpu.iota {dimensions = array<i32: 0>} : vector<16x128xi32>
      %21 = vector.broadcast %19 : i32 to vector<16x128xi32>
      %22 = arith.cmpi slt, %20, %21 : vector<16x128xi32>
      %cst_9 = arith.constant 0.000000e+00 : f32
      %23 = vector.broadcast %cst_9 : f32 to vector<16x128xf32>
      %24 = arith.select %22, %11, %23 : vector<16x128xi1>, vector<16x128xf32>
      %c0_10 = arith.constant 0 : index
      %c0_11 = arith.constant 0 : index
      %c0_12 = arith.constant 0 : index
      %25 = vector.load %arg4[%c0_10, %c0_11, %c0_12] : memref<1x1x128xf32, #tpu.memory_space<vmem>>, vector<1x1x128xf32>
      %26 = vector.shape_cast %25 : vector<1x1x128xf32> to vector<1x128xf32>
      %cst_13 = arith.constant dense<0.000000e+00> : vector<128xf32>
      %27 = vector.multi_reduction <add>, %24, %cst_13 [0] : vector<16x128xf32> to vector<128xf32>
      %28 = vector.shape_cast %27 : vector<128xf32> to vector<1x128xf32>
      %29 = arith.addf %26, %28 : vector<1x128xf32>
      %c0_14 = arith.constant 0 : index
      %c0_15 = arith.constant 0 : index
      %c0_16 = arith.constant 0 : index
      %30 = vector.load %arg4[%c0_14, %c0_15, %c0_16] : memref<1x1x128xf32, #tpu.memory_space<vmem>>, vector<1x1x128xf32>
      %31 = vector.shape_cast %30 : vector<1x1x128xf32> to vector<1x128xf32>
      %32 = vector.shape_cast %29 : vector<1x128xf32> to vector<1x1x128xf32>
      tpu.vector_store %arg4[%c0_14, %c0_15, %c0_16], %32 {strides = array<i32>} : memref<1x1x128xf32, #tpu.memory_space<vmem>>, vector<1x1x128xf32>,
    } else {
    }
    return
  }
  func.func @transform_0(%arg0: i32, %arg1: i32) -> (i32, i32) {
    %c1_i32 = arith.constant 1 : i32
    %0 = arith.muli %arg0, %c1_i32 : i32
    %1 = arith.addi %0, %arg1 : i32
    %c0_i32 = arith.constant 0 : i32
    %2 = arith.minsi %1, %c0_i32 : i32
    %c0_i32_0 = arith.constant 0 : i32
    %c0_i32_1 = arith.constant 0 : i32
    return %2, %c0_i32_0 : i32, i32
  }
  func.func @transform_1(%arg0: i32, %arg1: i32) -> (i32, i32) {
    %c1_i32 = arith.constant 1 : i32
    %0 = arith.muli %arg0, %c1_i32 : i32
    %1 = arith.addi %0, %arg1 : i32
    %c0_i32 = arith.constant 0 : i32
    %2 = arith.minsi %1, %c0_i32 : i32
    %c0_i32_0 = arith.constant 0 : i32
    %c0_i32_1 = arith.constant 0 : i32
    return %2, %c0_i32_0 : i32, i32
  }
  func.func @transform_2(%arg0: i32, %arg1: i32) -> (i32, i32, i32) {
    %c0_i32 = arith.constant 0 : i32
    %c0_i32_0 = arith.constant 0 : i32
    %c0_i32_1 = arith.constant 0 : i32
    return %arg0, %c0_i32, %c0_i32_0 : i32, i32, i32
  }
}

</mosaic_0001>

<llo_original>
// kernel: tpu_custom_call.1
$region0: #{tpu_custom_call.1}
  #allocation0 [shape = 'u32[]', space=smem, size = 0x4, offset = 0x4, fixed_abs, tag = 'smem constant byte address 0x4 - core index']
  #allocation1 [shape = 'u32[144,128]{1,0:T(1,128)}', space=vmem, size = 0x12000, scoped, tag = 'internal scratch']
  %s0 = inlined_call_operand.hbm [shape: f32[16,128], index: 0, kind: input, shape index: {}]
  %s1 = inlined_call_operand.hbm [shape: f32[16,128], index: 1, kind: input, shape index: {}]
  %s2 = inlined_call_operand.hbm [shape: f32[1,1,128], index: 2, kind: output, shape index: {}]
  %s3 = sld [smem:[#allocation0]]
  $region38: #{tpu_custom_call.1} parent=0
    _
  %s5 = ssub.s32 1, %s3
  %s6 = scalar_select 0, %s5, %s3
  $region1: #{tpu_custom_call.1} parent=0
    #allocation2 [shape = 'u8[8192]{0}', space=vmem, size = 0x2000, scoped, tag = 'input window, operand 0, single buffered']
    #allocation3 [shape = 's32[1]{0}', space=sflag, size = 0x4, scoped, tag = 'scoped memory for tpu_custom_call.1']
    #allocation4 [shape = 's32[1]{0}', space=sflag, size = 0x4, scoped, tag = 'scoped memory for tpu_custom_call.1']
    #allocation5 [shape = 'u8[8192]{0}', space=vmem, size = 0x2000, scoped, tag = 'input window, operand 1, single buffered']
    #allocation6 [shape = 's32[1]{0}', space=sflag, size = 0x4, scoped, tag = 'scoped memory for tpu_custom_call.1']
    #allocation7 [shape = 'u8[512]{0}', space=vmem, size = 0x400, scoped, tag = 'output window, operand 0, single buffered']
    %7 = vsyncpa [#allocation3], 0
    %8 = vsyncpa [#allocation6], 0
    %9 = vsyncpa [#allocation4], 0
    // Predicated region
    $region2: #{tpu_custom_call.1} parent=1 // pred_check
      _
    $region3: #{tpu_custom_call.1} parent=1 // pred_check_branch
      %11 = sbr.rel (0) target = $region5
    $region4: #{tpu_custom_call.1} parent=1 // pred_region
      %s12 = sadd.s32 0, 0
      %p13 = scmp.lt.s32.totalorder %s12, 0
      %s14 = scalar_select %p13, %s12, 0
      %s15 = smul.u32 2, %s14
      %s17 = ssub.s32 256, 256
      %18 = vsyncadd [#allocation3], %s17
      %s19 = smul.addr %s15, 128
      %s20 = scalar_lea.hbm %s0, %s19
      %s21 = sshll.u32 [#allocation2], 4
      %s22 = int_to_ptr.vmem [resolvable:$true] %s21
      %27 = dma.hbm_to_vmem [thread:$0]  %s20, 256, %s22, [#allocation3], 128, 128, 8
    $region5: #{tpu_custom_call.1} parent=1 // pred_fallthru
      _
    // Predicated region
    $region6: #{tpu_custom_call.1} parent=1 // pred_check
      _
    $region7: #{tpu_custom_call.1} parent=1 // pred_check_branch
      %29 = sbr.rel (0) target = $region9
    $region8: #{tpu_custom_call.1} parent=1 // pred_region
      %s30 = sadd.s32 0, 0
      %p31 = scmp.lt.s32.totalorder %s30, 0
      %s32 = scalar_select %p31, %s30, 0
      %s33 = smul.u32 2, %s32
      %s35 = ssub.s32 256, 256
      %36 = vsyncadd [#allocation6], %s35
      %s37 = smul.addr %s33, 128
      %s38 = scalar_lea.hbm %s1, %s37
      %s39 = sshll.u32 [#allocation5], 4
      %s40 = int_to_ptr.vmem [resolvable:$true] %s39
      %45 = dma.hbm_to_vmem [thread:$0]  %s38, 256, %s40, [#allocation6], 128, 128, 8
    $region9: #{tpu_custom_call.1} parent=1 // pred_fallthru
      _
    // Predicated region
    $region10: #{tpu_custom_call.1} parent=1 // pred_check
      _
    $region11: #{tpu_custom_call.1} parent=1 // pred_check_branch
      %47 = sbr.rel (0) target = $region13
    $region12: #{tpu_custom_call.1} parent=1 // pred_region
      %48 = dma.done [#allocation3], 256
    $region13: #{tpu_custom_call.1} parent=1 // pred_fallthru
      _
    // Predicated region
    $region14: #{tpu_custom_call.1} parent=1 // pred_check
      _
    $region15: #{tpu_custom_call.1} parent=1 // pred_check_branch
      %50 = sbr.rel (0) target = $region17
    $region16: #{tpu_custom_call.1} parent=1 // pred_region
      %51 = dma.done [#allocation6], 256
    $region17: #{tpu_custom_call.1} parent=1 // pred_fallthru
      _
    %s52 = sadd.s32 0, 0
    %p53 = scmp.lt.s32.totalorder %s52, 0
    %s54 = scalar_select %p53, %s52, 0
    %s55 = smul.u32 2, %s54
    %s56 = sadd.s32 0, 0
    %p57 = scmp.lt.s32.totalorder %s56, 0
    %s58 = scalar_select %p57, %s56, 0
    %s59 = smul.u32 2, %s58
    %s60 = sadd.s32 0, 0
    %p61 = scmp.eq.s32.totalorder 0, 0
    // Predicated region
    $region18: #{tpu_custom_call.1} parent=1 // pred_check
      %p62 = pneg %p61
    $region19: #{tpu_custom_call.1} parent=1 // pred_check_branch
      %64 = sbr.rel (%p62) target = $region21
    $region20: #{tpu_custom_call.1} parent=1 // pred_region
      %65 = vst [vmem:[#allocation7] sm:$0x1] 0.0
    $region21: #{tpu_custom_call.1} parent=1 // pred_fallthru
      _
    %v66 = vld [vmem:[#allocation2] sm:$0xff]
    %v67 = vld [vmem:[#allocation2 + $0x8] sm:$0xff]
    %v68 = vld [vmem:[#allocation5] sm:$0xff]
    %v69 = vld [vmem:[#allocation5 + $0x8] sm:$0xff]
    %v70 = vsub.f32 %v66, %v68
    %v71 = vsub.f32 %v67, %v69
    %v72 = vmul.f32 %v70, %v70
    %v73 = vmul.f32 %v71, %v71
    %v74 = vadd.f32 %v72, 1e-06
    %v75 = vadd.f32 %v73, 1e-06
    %v76 = vrsqrt.pop %v74
    %v77 = vmul.f32 %v74, %v76
    %vm78 = vcmp.eq.f32.partialorder %v74, inf
    %v79 = vsel %vm78, %v74, %v77
    %vm80 = vcmp.eq.f32.partialorder %v74, 0.0
    %v81 = vand.u32 %v74, 2147483648
    %v82 = vsel %vm80, %v81, %v79
    %v83 = vrsqrt.pop %v75
    %v84 = vmul.f32 %v75, %v83
    %vm85 = vcmp.eq.f32.partialorder %v75, inf
    %v86 = vsel %vm85, %v75, %v84
    %vm87 = vcmp.eq.f32.partialorder %v75, 0.0
    %v88 = vand.u32 %v75, 2147483648
    %v89 = vsel %vm87, %v88, %v86
    %p90 = scmp.lt.s32.totalorder %s60, 0
    // Predicated region
    $region22: #{tpu_custom_call.1} parent=1 // pred_check
      %p91 = pneg %p90
    $region23: #{tpu_custom_call.1} parent=1 // pred_check_branch
      %93 = sbr.rel (%p91) target = $region25
    $region24: #{tpu_custom_call.1} parent=1 // pred_region
      %v94 = vld [vmem:[#allocation7] sm:$0x1]
      %v95 = vadd.f32 %v82, %v89
      %v96 = vrot.slane %v95, 4
      %v97 = vadd.f32 %v95, %v96
      %v98 = vrot.slane %v97, 2
      %v99 = vadd.f32 %v97, %v98
      %v100 = vrot.slane %v99, 1
      %v101 = vadd.f32 %v99, %v100
      %v102 = vadd.f32 %v94, %v101
      %103 = vst [vmem:[#allocation7] sm:$0x1] %v102
    $region25: #{tpu_custom_call.1} parent=1 // pred_fallthru
      _
    %p104 = scmp.ge.s32.totalorder %s60, 0
    // Predicated region
    $region26: #{tpu_custom_call.1} parent=1 // pred_check
      %p105 = pneg %p104
    $region27: #{tpu_custom_call.1} parent=1 // pred_check_branch
      %107 = sbr.rel (%p105) target = $region29
    $region28: #{tpu_custom_call.1} parent=1 // pred_region
      %s108 = smul.u32 %s60, 16
      %s109 = ssub.s32 16, %s108
      %v110 = vlaneseq
      %v111 = vshrl.u32 %v110, 7
      %v112 = vadd.s32 %v111, 8
      %v113 = vstv %s109
      %vm114 = vcmp.lt.s32.totalorder %v111, %v113
      %vm115 = vcmp.lt.s32.totalorder %v112, %v113
      %v116 = vsel %vm114, %v82, 0.0
      %v117 = vsel %vm115, %v89, 0.0
      %v118 = vld [vmem:[#allocation7] sm:$0x1]
      %v119 = vadd.f32 %v116, %v117
      %v120 = vrot.slane %v119, 4
      %v121 = vadd.f32 %v119, %v120
      %v122 = vrot.slane %v121, 2
      %v123 = vadd.f32 %v121, %v122
      %v124 = vrot.slane %v123, 1
      %v125 = vadd.f32 %v123, %v124
      %v126 = vadd.f32 %v118, %v125
      %127 = vst [vmem:[#allocation7] sm:$0x1] %v126
    $region29: #{tpu_custom_call.1} parent=1 // pred_fallthru
      _
    // Predicated region
    $region30: #{tpu_custom_call.1} parent=1 // pred_check
      _
    $region31: #{tpu_custom_call.1} parent=1 // pred_check_branch
      %129 = sbr.rel (0) target = $region33
    $region32: #{tpu_custom_call.1} parent=1 // pred_region
      %s131 = ssub.s32 16, 16
      %132 = vsyncadd [#allocation4], %s131
      %s134 = sshll.u32 [#allocation7], 4
      %s135 = int_to_ptr.vmem [resolvable:$true] %s134
      %137 = dma.vmem_to_hbm [thread:$0]  %s135, 16, %s2, [#allocation4]
    $region33: #{tpu_custom_call.1} parent=1 // pred_fallthru
      _
    // Predicated region
    $region34: #{tpu_custom_call.1} parent=1 // pred_check
      _
    $region35: #{tpu_custom_call.1} parent=1 // pred_check_branch
      %139 = sbr.rel (0) target = $region37
    $region36: #{tpu_custom_call.1} parent=1 // pred_region
      %140 = dma.done [#allocation4], 16
    $region37: #{tpu_custom_call.1} parent=1 // pred_fallthru
      _
    %141 = vsyncpa [#allocation3], 1
    %142 = vsyncpa [#allocation6], 1
    %143 = vsyncpa [#allocation4], 1

</llo_original>
